<compile_context>
chip_gen: v7x
topology: tpu7x:2x2x1
jax: 0.10.0
libtpu: 0.0.40
codegen_flags: <defaults>
</compile_context>

<pallas_src>
import math

import jax
import jax.numpy as jnp
from jax.experimental import pallas as pl
from jax.experimental.pallas import tpu as pltpu

_MiB = 1024 * 1024


def _round_up(x, m):
    return ((x + m - 1) // m) * m


def _cdiv(a, b):
    return -(-a // b)


def _tpu_info():
    try:
        return pltpu.get_tpu_info()
    except Exception:
        return None


def _vmem_capacity_bytes():
    info = _tpu_info()
    if info is not None:
        for attr in ("vmem_capacity_bytes", "vmem_bytes", "vmem_size_bytes"):
            v = getattr(info, attr, None)
            if isinstance(v, int) and v > 0:
                return v
    # Conservative fallback: assume the smallest per-core VMEM (v7x, 64 MiB).
    return 64 * _MiB


def _num_tensorcores():
    info = _tpu_info()
    if info is not None:
        for attr in ("num_cores", "core_count", "num_tensorcores",
                     "tensorcores_per_chip"):
            v = getattr(info, attr, None)
            if isinstance(v, int) and v > 0:
                return v
    try:
        kind = (getattr(jax.devices()[0], "device_kind", "") or "").lower()
    except Exception:
        kind = ""
    # Megacore generations expose 2 TensorCores behind one device.
    if any(tag in kind for tag in ("v4", "v5p", "v7")):
        return 2
    return 1


# ----------------------------------------------------------------------------
# Kernels
# ----------------------------------------------------------------------------

def _ffn_resident_kernel(x_ref, w1_ref, b1_ref, w2_ref, b2_ref, o_ref):
    """Weights resident in VMEM; one pair of dots over the full d_ff."""
    h = jnp.dot(x_ref[...], w1_ref[...], preferred_element_type=jnp.float32)
    h = jnp.maximum(h + b1_ref[...].astype(jnp.float32), 0.0)   # ReLU
    y = jnp.dot(h.astype(w2_ref.dtype), w2_ref[...],
                preferred_element_type=jnp.float32)
    o_ref[...] = (y + b2_ref[...].astype(jnp.float32)).astype(o_ref.dtype)


def _ffn_stream_kernel_f32out(x_ref, w1_ref, b1_ref, w2_ref, b2_ref, o_ref):
    """d_ff streamed; f32 output accumulates directly into resident o_ref."""
    k = pl.program_id(1)

    @pl.when(k == 0)
    def _():
        o_ref[...] = jnp.broadcast_to(b2_ref[...].astype(o_ref.dtype),
                                      o_ref.shape)

    h = jnp.dot(x_ref[...], w1_ref[...], preferred_element_type=jnp.float32)
    h = jnp.maximum(h + b1_ref[...].astype(jnp.float32), 0.0)
    o_ref[...] += jnp.dot(h.astype(w2_ref.dtype), w2_ref[...],
                          preferred_element_type=jnp.float32)


def _ffn_stream_kernel_acc(x_ref, w1_ref, b1_ref, w2_ref, b2_ref, o_ref,
                           acc_ref):
    """d_ff streamed; f32 scratch accumulator for non-f32 outputs."""
    k = pl.program_id(1)

    @pl.when(k == 0)
    def _():
        acc_ref[...] = jnp.zeros_like(acc_ref)

    h = jnp.dot(x_ref[...], w1_ref[...], preferred_element_type=jnp.float32)
    h = jnp.maximum(h + b1_ref[...].astype(jnp.float32), 0.0)
    acc_ref[...] += jnp.dot(h.astype(w2_ref.dtype), w2_ref[...],
                            preferred_element_type=jnp.float32)

    @pl.when(k == pl.num_programs(1) - 1)
    def _():
        o_ref[...] = (acc_ref[...]
                      + b2_ref[...].astype(jnp.float32)).astype(o_ref.dtype)


# ----------------------------------------------------------------------------
# Host wrapper
# ----------------------------------------------------------------------------

def positionwise_feed_forward(x, w1, b1, w2, b2, *, tm=None, tff=512,
                              compute_dtype=None, vmem_limit_bytes=None,
                              weights_resident=None):
    """x: (..., d_model); w1: (d_model, d_ff); w2: (d_ff, d_model).

    compute_dtype: optionally cast x/w1/w2 (e.g. jnp.bfloat16) for the MXU;
    accumulation stays f32. None keeps the input precision exactly.
    weights_resident: None=auto, True/False force the path (for testing).
    """
    orig_shape = x.shape
    out_dtype = x.dtype
    d_model = orig_shape[-1]
    d_ff = w1.shape[1]

    x2 = x.reshape(-1, d_model)
    M = x2.shape[0]

    if compute_dtype is not None:
        x2 = x2.astype(compute_dtype)
        w1 = w1.astype(compute_dtype)
        w2 = w2.astype(compute_dtype)

    x_item = jnp.dtype(x2.dtype).itemsize
    w_item = jnp.dtype(w1.dtype).itemsize
    o_item = jnp.dtype(out_dtype).itemsize
    b_item = jnp.dtype(b1.dtype).itemsize
    sublane = max(8, 32 // max(1, min(x_item, o_item)))   # 8 f32 / 16 bf16

    # ---- hardware-derived budgets --------------------------------------
    num_cores = _num_tensorcores()
    if vmem_limit_bytes is None:
        cap = _vmem_capacity_bytes()
        # ~56 MiB on v7x (64 MiB physical), ~100 MiB on v5e/v6e (128 MiB).
        vmem_limit_bytes = min(cap - max(8 * _MiB, cap // 8), 100 * _MiB)
    vmem_limit_bytes = int(vmem_limit_bytes)
    fit_budget = int(vmem_limit_bytes * 0.9)   # headroom for compiler scratch

    if tm is None:
        tm_target = 1024 if vmem_limit_bytes >= 96 * _MiB else 512
    else:
        tm_target = max(int(tm), sublane)

    # ---- conservative VMEM estimates (count double buffers everywhere) --
    def resident_bytes(t):
        weights = 2 * (d_model * d_ff + d_ff * d_model) * w_item
        biases = 2 * 2 * (d_ff + d_model) * b_item
        x_tile = 2 * t * d_model * x_item
        o_tile = 2 * t * d_model * o_item
        h_tmp = t * _round_up(d_ff, 128) * 4          # f32 intermediate
        return weights + biases + x_tile + o_tile + h_tmp

    def stream_bytes(t, kf, use_acc):
        w_tiles = 2 * 2 * d_model * kf * w_item
        biases = 2 * 2 * (kf + d_model) * b_item
        x_tile = 2 * t * d_model * x_item
        o_tile = 2 * t * d_model * o_item
        acc = t * d_model * 4 if use_acc else 0
        h_tmp = t * kf * 4
        return w_tiles + biases + x_tile + o_tile + acc + h_tmp

    def pick_tm(fits):
        t = _round_up(min(tm_target, _round_up(M, sublane)), sublane)
        while t > sublane and not fits(t):
            t = _round_up(max(t // 2, sublane), sublane)
        return t if fits(t) else None

    # ---- path selection -------------------------------------------------
    use_acc = jnp.dtype(out_dtype) != jnp.float32
    resident_tm = pick_tm(lambda t: resident_bytes(t) <= fit_budget)
    if weights_resident is None:
        weights_resident = (resident_tm is not None
                            and resident_tm >= min(256, _round_up(M, sublane)))
    if weights_resident and resident_tm is None:
        weights_resident = False      # forced resident but does not fit

    if weights_resident:
        dff_pad = d_ff                # full-dim blocks: no padding needed
        tm_fit = resident_tm
    else:
        # Lane-aligned d_ff tile; keep it a multiple of 256 (MXU depth on
        # v6e/v7x) when d_ff allows.  v5e is fine with multiples of 128.
        lane_mult = 256 if d_ff > 128 else 128
        tff = max(128, _round_up(int(tff), 128))
        tff = min(tff, _round_up(d_ff, lane_mult))
        dff_pad = _round_up(d_ff, tff)
        tm_fit = pick_tm(lambda t: stream_bytes(t, tff, use_acc) <= fit_budget)
        if tm_fit is None:
            tm_fit = sublane

    # ---- row tiling: pad only to the sublane multiple, balance tiles,
    #      and give each TensorCore work on megacore chips ----------------
    M_pad8 = _round_up(max(M, 1), sublane)
    min_tiles = 2 if (num_cores >= 2 and M_pad8 >= 2 * sublane) else 1
    ntiles = max(_cdiv(M_pad8, tm_fit), min_tiles)
    ntiles = max(1, min(ntiles, M_pad8 // sublane))
    tm_eff = _round_up(_cdiv(M_pad8, ntiles), sublane)
    M_pad = tm_eff * ntiles

    if M_pad != M:
        x2 = jnp.pad(x2, ((0, M_pad - M), (0, 0)))

    if (not weights_resident) and dff_pad != d_ff:
        # Exact: padded hidden units are relu(0 + 0) = 0, contribute nothing.
        w1 = jnp.pad(w1, ((0, 0), (0, dff_pad - d_ff)))
        b1 = jnp.pad(b1, (0, dff_pad - d_ff))
        w2 = jnp.pad(w2, ((0, dff_pad - d_ff), (0, 0)))

    b1_2d = b1.reshape(1, -1)
    b2_2d = b2.reshape(1, d_model)

    # ---- cost estimate ---------------------------------------------------
    weight_bytes = ((w1.size + w2.size) * w_item
                    + (b1_2d.size + b2_2d.size) * b_item)
    weight_passes = 1 if weights_resident else ntiles
    cost = pl.CostEstimate(
        flops=4 * M_pad * d_model * dff_pad,          # two matmuls
        transcendentals=0,
        bytes_accessed=(M_pad * d_model * (x_item + o_item)
                        + weight_passes * weight_bytes),
    )

    # ---- build the pallas_call ------------------------------------------
    if weights_resident:
        grid = (ntiles,)
        in_specs = [
            pl.BlockSpec((tm_eff, d_model), lambda i: (i, 0)),
            pl.BlockSpec((d_model, d_ff), lambda i: (0, 0)),   # resident
            pl.BlockSpec((1, d_ff), lambda i: (0, 0)),          # resident
            pl.BlockSpec((d_ff, d_model), lambda i: (0, 0)),    # resident
            pl.BlockSpec((1, d_model), lambda i: (0, 0)),       # resident
        ]
        out_specs = pl.BlockSpec((tm_eff, d_model), lambda i: (i, 0))
        kernel = _ffn_resident_kernel
        scratch_shapes = []
        dim_sem = ("parallel",)
    else:
        grid = (ntiles, dff_pad // tff)
        in_specs = [
            pl.BlockSpec((tm_eff, d_model), lambda i, k: (i, 0)),
            pl.BlockSpec((d_model, tff), lambda i, k: (0, k)),
            pl.BlockSpec((1, tff), lambda i, k: (0, k)),
            pl.BlockSpec((tff, d_model), lambda i, k: (k, 0)),
            pl.BlockSpec((1, d_model), lambda i, k: (0, 0)),
        ]
        out_specs = pl.BlockSpec((tm_eff, d_model), lambda i, k: (i, 0))
        if use_acc:
            kernel = _ffn_stream_kernel_acc
            scratch_shapes = [pltpu.VMEM((tm_eff, d_model), jnp.float32)]
        else:
            kernel = _ffn_stream_kernel_f32out
            scratch_shapes = []
        dim_sem = ("parallel", "arbitrary")

    out = pl.pallas_call(
        kernel,
        out_shape=jax.ShapeDtypeStruct((M_pad, d_model), out_dtype),
        grid_spec=pltpu.PrefetchScalarGridSpec(
            num_scalar_prefetch=0,
            grid=grid,
            in_specs=in_specs,
            out_specs=out_specs,
            scratch_shapes=scratch_shapes,
        ),
        compiler_params=pltpu.CompilerParams(
            dimension_semantics=dim_sem,
            vmem_limit_bytes=vmem_limit_bytes,
        ),
        cost_estimate=cost,
    )(x2, w1, b1_2d, w2, b2_2d)

    if M_pad != M:
        out = out[:M]
    return out.reshape(orig_shape)


def init_params(key, d_model, d_ff, dtype=jnp.float32):
    """Deterministic init mimicking nn.Linear (uniform +/- 1/sqrt(fan_in)).
    Weights are returned already transposed for row-major matmul."""
    k1, k2, k3, k4 = jax.random.split(key, 4)
    bound1 = 1.0 / math.sqrt(d_model)
    bound2 = 1.0 / math.sqrt(d_ff)
    w1 = jax.random.uniform(k1, (d_model, d_ff), dtype, -bound1, bound1)
    b1 = jax.random.uniform(k2, (d_ff,), dtype, -bound1, bound1)
    w2 = jax.random.uniform(k3, (d_ff, d_model), dtype, -bound2, bound2)
    b2 = jax.random.uniform(k4, (d_model,), dtype, -bound2, bound2)
    return w1, b1, w2, b2


def _reference(x, w1, b1, w2, b2):
    return jnp.maximum(x @ w1 + b1, 0.0) @ w2 + b2


if __name__ == "__main__":
    key = jax.random.PRNGKey(0)

    # Case 1: tiny FFN -> weights-resident fast path, exact f32.
    batch, seq, d_model, d_ff = 2, 8, 32, 64
    kx, kp, key = jax.random.split(key, 3)
    x = jax.random.normal(kx, (batch, seq, d_model), jnp.float32)
    w1, b1, w2, b2 = init_params(kp, d_model, d_ff)
    y = jax.block_until_ready(positionwise_feed_forward(x, w1, b1, w2, b2))
    ref = _reference(x, w1, b1, w2, b2)
    assert y.shape == x.shape
    assert jnp.allclose(y, ref, atol=1e-4, rtol=1e-4)

    # Case 2: ragged M (15 rows) + multi-step d_ff reduction on the streaming
    # path; f32 output accumulates directly into o_ref (no scratch).
    batch, seq, d_model, d_ff = 3, 5, 32, 256
    kx, kp, key = jax.random.split(key, 3)
    x = jax.random.normal(kx, (batch, seq, d_model), jnp.float32)
    w1, b1, w2, b2 = init_params(kp, d_model, d_ff)
    y = jax.block_until_ready(positionwise_feed_forward(
        x, w1, b1, w2, b2, tm=8, tff=128, weights_resident=False))
    ref = _reference(x, w1, b1, w2, b2)
    assert y.shape == x.shape
    assert jnp.allclose(y, ref, atol=1e-4, rtol=1e-4)

    # Case 3: bf16 compute path (f32 params cast to bf16 for the MXU, f32
    # accumulation) on the resident path; tolerance reflects bf16 rounding.
    batch, seq, d_model, d_ff = 2, 16, 128, 256
    kx, kp, key = jax.random.split(key, 3)
    x = jax.random.normal(kx, (batch, seq, d_model), jnp.float32)
    w1, b1, w2, b2 = init_params(kp, d_model, d_ff)
    y = jax.block_until_ready(positionwise_feed_forward(
        x, w1, b1, w2, b2, compute_dtype=jnp.bfloat16))
    ref = _reference(x, w1, b1, w2, b2)
    assert y.shape == x.shape and y.dtype == x.dtype
    assert jnp.allclose(y, ref, atol=5e-2, rtol=5e-2)

    # Case 4: bf16 activations/weights with streaming reduction -> exercises
    # the f32 scratch-accumulator kernel (non-f32 output dtype).
    batch, seq, d_model, d_ff = 2, 8, 128, 256
    kx, kp, key = jax.random.split(key, 3)
    x = jax.random.normal(kx, (batch, seq, d_model), jnp.bfloat16)
    w1, b1, w2, b2 = init_params(kp, d_model, d_ff, dtype=jnp.bfloat16)
    y = jax.block_until_ready(positionwise_feed_forward(
        x, w1, b1, w2, b2, tm=16, tff=128, weights_resident=False))
    ref = _reference(x.astype(jnp.float32), w1.astype(jnp.float32),
                     b1.astype(jnp.float32), w2.astype(jnp.float32),
                     b2.astype(jnp.float32))
    assert y.shape == x.shape and y.dtype == x.dtype
    assert jnp.allclose(y.astype(jnp.float32), ref, atol=5e-2, rtol=5e-2)

    print("KERNEL_OK")
</pallas_src>

<mosaic_0001>
module attributes {stable_mosaic.version = 11 : i64} {
  func.func @_ffn_resident_kernel(%arg0: i32, %arg1: memref<16x32xf32, #tpu.memory_space<vmem>>, %arg2: memref<32x64xf32, #tpu.memory_space<vmem>>, %arg3: memref<1x64xf32, #tpu.memory_space<vmem>>, %arg4: memref<64x32xf32, #tpu.memory_space<vmem>>, %arg5: memref<1x32xf32, #tpu.memory_space<vmem>>, %arg6: memref<16x32xf32, #tpu.memory_space<vmem>>) attributes {dimension_semantics = [#tpu.dimension_semantics<parallel>], iteration_bounds = array<i64: 1>, scalar_prefetch = 0 : i64, scratch_operands = 0 : i64, tpu.core_type = #tpu.core_type<tc>, window_params = [{transform_indices = @transform_0, window_bounds = array<i64: 16, 32>}, {pipeline_mode = #tpu.pipeline_mode<synchronous>, transform_indices = @transform_1, window_bounds = array<i64: 32, 64>}, {pipeline_mode = #tpu.pipeline_mode<synchronous>, transform_indices = @transform_2, window_bounds = array<i64: 1, 64>}, {pipeline_mode = #tpu.pipeline_mode<synchronous>, transform_indices = @transform_3, window_bounds = array<i64: 64, 32>}, {pipeline_mode = #tpu.pipeline_mode<synchronous>, transform_indices = @transform_4, window_bounds = array<i64: 1, 32>}, {transform_indices = @transform_5, window_bounds = array<i64: 16, 32>}]} {
    %c0 = arith.constant 0 : index
    %c0_0 = arith.constant 0 : index
    %0 = vector.load %arg1[%c0, %c0_0] : memref<16x32xf32, #tpu.memory_space<vmem>>, vector<16x32xf32>
    %c0_1 = arith.constant 0 : index
    %c0_2 = arith.constant 0 : index
    %1 = vector.load %arg2[%c0_1, %c0_2] : memref<32x64xf32, #tpu.memory_space<vmem>>, vector<32x64xf32>
    %cst = arith.constant dense<0.000000e+00> : vector<16x64xf32>
    %2 = tpu.matmul %0, %1, %cst {dimension_numbers = #tpu.dot_dimension_numbers<[1], [0], [0], [1], [0, 0, 1, 1], [], []>} : vector<16x32xf32>, vector<32x64xf32>, vector<16x64xf32> -> vector<16x64xf32>
    %c0_3 = arith.constant 0 : index
    %c0_4 = arith.constant 0 : index
    %3 = vector.load %arg3[%c0_3, %c0_4] : memref<1x64xf32, #tpu.memory_space<vmem>>, vector<1x64xf32>
    %4 = vector.broadcast %3 : vector<1x64xf32> to vector<16x64xf32>
    %5 = arith.addf %2, %4 : vector<16x64xf32>
    %cst_5 = arith.constant 0.000000e+00 : f32
    %6 = vector.broadcast %cst_5 : f32 to vector<16x64xf32>
    %7 = arith.maximumf %5, %6 : vector<16x64xf32>
    %c0_6 = arith.constant 0 : index
    %c0_7 = arith.constant 0 : index
    %8 = vector.load %arg4[%c0_6, %c0_7] : memref<64x32xf32, #tpu.memory_space<vmem>>, vector<64x32xf32>
    %cst_8 = arith.constant dense<0.000000e+00> : vector<16x32xf32>
    %9 = tpu.matmul %7, %8, %cst_8 {dimension_numbers = #tpu.dot_dimension_numbers<[1], [0], [0], [1], [0, 0, 1, 1], [], []>} : vector<16x64xf32>, vector<64x32xf32>, vector<16x32xf32> -> vector<16x32xf32>
    %c0_9 = arith.constant 0 : index
    %c0_10 = arith.constant 0 : index
    %10 = vector.load %arg5[%c0_9, %c0_10] : memref<1x32xf32, #tpu.memory_space<vmem>>, vector<1x32xf32>
    %11 = vector.broadcast %10 : vector<1x32xf32> to vector<16x32xf32>
    %12 = arith.addf %9, %11 : vector<16x32xf32>
    %c0_11 = arith.constant 0 : index
    %c0_12 = arith.constant 0 : index
    %13 = vector.load %arg6[%c0_11, %c0_12] : memref<16x32xf32, #tpu.memory_space<vmem>>, vector<16x32xf32>
    tpu.vector_store %arg6[%c0_11, %c0_12], %12 {strides = array<i32>} : memref<16x32xf32, #tpu.memory_space<vmem>>, vector<16x32xf32>,
    return
  }
  func.func @transform_0(%arg0: i32) -> (i32, i32) {
    %c0_i32 = arith.constant 0 : i32
    %c0_i32_0 = arith.constant 0 : i32
    return %arg0, %c0_i32 : i32, i32
  }
  func.func @transform_1(%arg0: i32) -> (i32, i32) {
    %c0_i32 = arith.constant 0 : i32
    %c0_i32_0 = arith.constant 0 : i32
    %c0_i32_1 = arith.constant 0 : i32
    return %c0_i32, %c0_i32_0 : i32, i32
  }
  func.func @transform_2(%arg0: i32) -> (i32, i32) {
    %c0_i32 = arith.constant 0 : i32
    %c0_i32_0 = arith.constant 0 : i32
    %c0_i32_1 = arith.constant 0 : i32
    return %c0_i32, %c0_i32_0 : i32, i32
  }
  func.func @transform_3(%arg0: i32) -> (i32, i32) {
    %c0_i32 = arith.constant 0 : i32
    %c0_i32_0 = arith.constant 0 : i32
    %c0_i32_1 = arith.constant 0 : i32
    return %c0_i32, %c0_i32_0 : i32, i32
  }
  func.func @transform_4(%arg0: i32) -> (i32, i32) {
    %c0_i32 = arith.constant 0 : i32
    %c0_i32_0 = arith.constant 0 : i32
    %c0_i32_1 = arith.constant 0 : i32
    return %c0_i32, %c0_i32_0 : i32, i32
  }
  func.func @transform_5(%arg0: i32) -> (i32, i32) {
    %c0_i32 = arith.constant 0 : i32
    %c0_i32_0 = arith.constant 0 : i32
    return %arg0, %c0_i32 : i32, i32
  }
}

</mosaic_0001>

<llo_original>
// kernel: tpu_custom_call.1
$region0: #{tpu_custom_call.1}
  #allocation0 [shape = 'u32[]', space=smem, size = 0x4, offset = 0x4, fixed_abs, tag = 'smem constant byte address 0x4 - core index']
  #allocation1 [shape = 'u32[144,128]{1,0:T(1,128)}', space=vmem, size = 0x12000, scoped, tag = 'internal scratch']
  %s0 = inlined_call_operand.vmem [shape: f32[16,32], index: 0, kind: input, shape index: {}]
  %s1 = inlined_call_operand.vmem [shape: f32[32,64], index: 1, kind: input, shape index: {}]
  %s2 = inlined_call_operand.vmem [shape: f32[1,64], index: 2, kind: input, shape index: {}]
  %s3 = inlined_call_operand.vmem [shape: f32[64,32], index: 3, kind: input, shape index: {}]
  %s4 = inlined_call_operand.vmem [shape: f32[1,32], index: 4, kind: input, shape index: {}]
  %s5 = inlined_call_operand.hbm [shape: f32[16,32], index: 5, kind: output, shape index: {}]
  %s6 = sld [smem:[#allocation0]]
  $region30: #{tpu_custom_call.1} parent=0
    _
  %s8 = ssub.s32 1, %s6
  %s9 = scalar_select 0, %s8, %s6
  $region1: #{tpu_custom_call.1} parent=0
    #allocation2 [shape = 'u8[8192]{0}', space=vmem, size = 0x2000, scoped, tag = 'output window, operand 0, single buffered']
    #allocation3 [shape = 's32[1]{0}', space=sflag, size = 0x4, scoped, tag = 'scoped memory for tpu_custom_call.1']
    %10 = vsyncpa [#allocation3], 0
    // Predicated region
    $region2: #{tpu_custom_call.1} parent=1 // pred_check
      _
    $region3: #{tpu_custom_call.1} parent=1 // pred_check_branch
      %12 = sbr.rel (0) target = $region5
    $region4: #{tpu_custom_call.1} parent=1 // pred_region
      _
    $region5: #{tpu_custom_call.1} parent=1 // pred_fallthru
      _
    // Predicated region
    $region6: #{tpu_custom_call.1} parent=1 // pred_check
      _
    $region7: #{tpu_custom_call.1} parent=1 // pred_check_branch
      %14 = sbr.rel (0) target = $region9
    $region8: #{tpu_custom_call.1} parent=1 // pred_region
      _
    $region9: #{tpu_custom_call.1} parent=1 // pred_fallthru
      _
    // Predicated region
    $region10: #{tpu_custom_call.1} parent=1 // pred_check
      _
    $region11: #{tpu_custom_call.1} parent=1 // pred_check_branch
      %16 = sbr.rel (0) target = $region13
    $region12: #{tpu_custom_call.1} parent=1 // pred_region
      _
    $region13: #{tpu_custom_call.1} parent=1 // pred_fallthru
      _
    // Predicated region
    $region14: #{tpu_custom_call.1} parent=1 // pred_check
      _
    $region15: #{tpu_custom_call.1} parent=1 // pred_check_branch
      %18 = sbr.rel (0) target = $region17
    $region16: #{tpu_custom_call.1} parent=1 // pred_region
      _
    $region17: #{tpu_custom_call.1} parent=1 // pred_fallthru
      _
    // Predicated region
    $region18: #{tpu_custom_call.1} parent=1 // pred_check
      _
    $region19: #{tpu_custom_call.1} parent=1 // pred_check_branch
      %20 = sbr.rel (0) target = $region21
    $region20: #{tpu_custom_call.1} parent=1 // pred_region
      _
    $region21: #{tpu_custom_call.1} parent=1 // pred_fallthru
      _
    %v21 = vld [vmem:[%s0] sm:$0xff]
    %v22 = vld [vmem:[%s0 + $0x8] sm:$0xff]
    %v23 = vld [vmem:[%s1] sm:$0xff]
    %v24 = vld [vmem:[%s1 + $0x8] sm:$0xff]
    %v25 = vld [vmem:[%s1 + $0x10] sm:$0xff]
    %v26 = vld [vmem:[%s1 + $0x18] sm:$0xff]
    %v27 = vld [vmem:[%s2] sm:$0x1]
    %v29 = vlaneseq
    %v30 = vshrl.u32 %v29, 7
    %v31 = vsub.s32 0, %v30
    %v32 = vrot.slane %v27, %v31
    %vm34 = vcmask 261120
    %v36 = vsel %vm34, %v21, 0
    %v39 = vsel %vm34, %v22, 0
    %41 = vmatprep.subr.mxu0 0.0
    %42 = vmatpush1.msra.mxu0 %v23
    %43 = vmatprep.subr.mxu0 0.0
    %44 = vmatpush1.msra.mxu0 %v24
    %45 = vmatprep.subr.mxu0 0.0
    %46 = vmatpush1.msra.mxu0 %v25
    %47 = vmatprep.subr.mxu0 0.0
    %48 = vmatpush1.msra.mxu0 %v26
    %49 = vmatprep.subr.mxu0 0.0
    %50 = vmatpush1.msra.mxu0 0.0
    %51 = vmatprep.subr.mxu0 0.0
    %52 = vmatpush1.msra.mxu0 0.0
    %53 = vmatprep.subr.mxu0 0.0
    %54 = vmatpush1.msra.mxu0 0.0
    %55 = vmatprep.subr.mxu0 0.0
    %56 = vmatpush1.msra.mxu0 0.0
    %57 = vmatprep.subr.mxu0 0.0
    %58 = vmatpush1.msra.mxu0 0.0
    %59 = vmatprep.subr.mxu0 0.0
    %60 = vmatpush1.msra.mxu0 0.0
    %61 = vmatprep.subr.mxu0 0.0
    %62 = vmatpush1.msra.mxu0 0.0
    %63 = vmatprep.subr.mxu0 0.0
    %64 = vmatpush1.msra.mxu0 0.0
    %65 = vmatprep.subr.mxu0 0.0
    %66 = vmatpush1.msra.mxu0 0.0
    %67 = vmatprep.subr.mxu0 0.0
    %68 = vmatpush1.msra.mxu0 0.0
    %69 = vmatprep.subr.mxu0 0.0
    %70 = vmatpush1.msra.mxu0 0.0
    %71 = vmatprep.subr.mxu0 0.0
    %72 = vmatpush1.msra.mxu0 0.0
    %73 = vmatprep.subr.mxu0 0.0
    %74 = vmatpush1.msra.mxu0 0.0
    %75 = vmatprep.subr.mxu0 0.0
    %76 = vmatpush1.msra.mxu0 0.0
    %77 = vmatprep.subr.mxu0 0.0
    %78 = vmatpush1.msra.mxu0 0.0
    %79 = vmatprep.subr.mxu0 0.0
    %80 = vmatpush1.msra.mxu0 0.0
    %81 = vmatprep.subr.mxu0 0.0
    %82 = vmatpush1.msra.mxu0 0.0
    %83 = vmatprep.subr.mxu0 0.0
    %84 = vmatpush1.msra.mxu0 0.0
    %85 = vmatprep.subr.mxu0 0.0
    %86 = vmatpush1.msra.mxu0 0.0
    %87 = vmatprep.subr.mxu0 0.0
    %88 = vmatpush1.msra.mxu0 0.0
    %89 = vmatprep.subr.mxu0 0.0
    %90 = vmatpush1.msra.mxu0 0.0
    %91 = vmatprep.subr.mxu0 0.0
    %92 = vmatpush1.msra.mxu0 0.0
    %93 = vmatprep.subr.mxu0 0.0
    %94 = vmatpush1.msra.mxu0 0.0
    %95 = vmatprep.subr.mxu0 0.0
    %96 = vmatpush1.msra.mxu0 0.0
    %97 = vmatprep.subr.mxu0 0.0
    %98 = vmatpush1.msra.mxu0 0.0
    %99 = vmatprep.subr.mxu0 0.0
    %100 = vmatpush1.msra.mxu0 0.0
    %101 = vmatprep.subr.mxu0 0.0
    %102 = vmatpush1.msra.mxu0 0.0
    %103 = vmatprep.subr.mxu0 0.0
    %104 = vmatpush1.msra.mxu0 0.0
    %105 = vmatprep.mubr.f32.mxu0 0.0
    %106 = vmatmul.mubr.f32.gmra.mrb[0].mxu0 %v36
    %v107 = vpop.f32.mrb[0].mxu0
    %v108 = vadd.f32 %v32, %v107
    %v109 = vpop.f32.mrb[0].mxu0
    %110 = vmatprep.mubr.f32.mxu0 0.0
    %111 = vmatmul.mubr.f32.gmra.mrb[0].mxu0 %v39
    %v112 = vpop.f32.mrb[0].mxu0
    %v113 = vadd.f32 %v32, %v112
    %v114 = vpop.f32.mrb[0].mxu0
    %115 = vdwg.mxu0
    %v116 = vmax.f32 %v108, 0.0
    %v117 = vmax.f32 %v113, 0.0
    %v118 = vld [vmem:[%s3] sm:$0xff]
    %v119 = vld [vmem:[%s3 + $0x8] sm:$0xff]
    %v120 = vld [vmem:[%s3 + $0x10] sm:$0xff]
    %v121 = vld [vmem:[%s3 + $0x18] sm:$0xff]
    %v122 = vld [vmem:[%s3 + $0x20] sm:$0xff]
    %v123 = vld [vmem:[%s3 + $0x28] sm:$0xff]
    %v124 = vld [vmem:[%s3 + $0x30] sm:$0xff]
    %v125 = vld [vmem:[%s3 + $0x38] sm:$0xff]
    %v126 = vld [vmem:[%s4] sm:$0x1]
    %v128 = vlaneseq
    %v129 = vshrl.u32 %v128, 7
    %v130 = vsub.s32 0, %v129
    %v131 = vrot.slane %v126, %v130
    %vm133 = vcmask 523264
    %v135 = vsel %vm133, %v116, 0
    %v138 = vsel %vm133, %v117, 0
    %140 = vmatprep.subr.mxu0 0.0
    %141 = vmatpush1.msra.mxu0 %v118
    %142 = vmatprep.subr.mxu0 0.0
    %143 = vmatpush1.msra.mxu0 %v119
    %144 = vmatprep.subr.mxu0 0.0
    %145 = vmatpush1.msra.mxu0 %v120
    %146 = vmatprep.subr.mxu0 0.0
    %147 = vmatpush1.msra.mxu0 %v121
    %148 = vmatprep.subr.mxu0 0.0
    %149 = vmatpush1.msra.mxu0 %v122
    %150 = vmatprep.subr.mxu0 0.0
    %151 = vmatpush1.msra.mxu0 %v123
    %152 = vmatprep.subr.mxu0 0.0
    %153 = vmatpush1.msra.mxu0 %v124
    %154 = vmatprep.subr.mxu0 0.0
    %155 = vmatpush1.msra.mxu0 %v125
    %156 = vmatprep.subr.mxu0 0.0
    %157 = vmatpush1.msra.mxu0 0.0
    %158 = vmatprep.subr.mxu0 0.0
    %159 = vmatpush1.msra.mxu0 0.0
    %160 = vmatprep.subr.mxu0 0.0
    %161 = vmatpush1.msra.mxu0 0.0
    %162 = vmatprep.subr.mxu0 0.0
    %163 = vmatpush1.msra.mxu0 0.0
    %164 = vmatprep.subr.mxu0 0.0
    %165 = vmatpush1.msra.mxu0 0.0
    %166 = vmatprep.subr.mxu0 0.0
    %167 = vmatpush1.msra.mxu0 0.0
    %168 = vmatprep.subr.mxu0 0.0
    %169 = vmatpush1.msra.mxu0 0.0
    %170 = vmatprep.subr.mxu0 0.0
    %171 = vmatpush1.msra.mxu0 0.0
    %172 = vmatprep.subr.mxu0 0.0
    %173 = vmatpush1.msra.mxu0 0.0
    %174 = vmatprep.subr.mxu0 0.0
    %175 = vmatpush1.msra.mxu0 0.0
    %176 = vmatprep.subr.mxu0 0.0
    %177 = vmatpush1.msra.mxu0 0.0
    %178 = vmatprep.subr.mxu0 0.0
    %179 = vmatpush1.msra.mxu0 0.0
    %180 = vmatprep.subr.mxu0 0.0
    %181 = vmatpush1.msra.mxu0 0.0
    %182 = vmatprep.subr.mxu0 0.0
    %183 = vmatpush1.msra.mxu0 0.0
    %184 = vmatprep.subr.mxu0 0.0
    %185 = vmatpush1.msra.mxu0 0.0
    %186 = vmatprep.subr.mxu0 0.0
    %187 = vmatpush1.msra.mxu0 0.0
    %188 = vmatprep.subr.mxu0 0.0
    %189 = vmatpush1.msra.mxu0 0.0
    %190 = vmatprep.subr.mxu0 0.0
    %191 = vmatpush1.msra.mxu0 0.0
    %192 = vmatprep.subr.mxu0 0.0
    %193 = vmatpush1.msra.mxu0 0.0
    %194 = vmatprep.subr.mxu0 0.0
    %195 = vmatpush1.msra.mxu0 0.0
    %196 = vmatprep.subr.mxu0 0.0
    %197 = vmatpush1.msra.mxu0 0.0
    %198 = vmatprep.subr.mxu0 0.0
    %199 = vmatpush1.msra.mxu0 0.0
    %200 = vmatprep.subr.mxu0 0.0
    %201 = vmatpush1.msra.mxu0 0.0
    %202 = vmatprep.subr.mxu0 0.0
    %203 = vmatpush1.msra.mxu0 0.0
    %204 = vmatprep.mubr.f32.mxu0 0.0
    %205 = vmatmul.mubr.f32.gmra.mrb[0].mxu0 %v135
    %v206 = vpop.f32.mrb[0].mxu0
    %v207 = vadd.f32 %v131, %v206
    %v208 = vpop.f32.mrb[0].mxu0
    %209 = vmatprep.mubr.f32.mxu0 0.0
    %210 = vmatmul.mubr.f32.gmra.mrb[0].mxu0 %v138
    %v211 = vpop.f32.mrb[0].mxu0
    %v212 = vadd.f32 %v131, %v211
    %v213 = vpop.f32.mrb[0].mxu0
    %214 = vdwg.mxu0
    %215 = vst.msk [vmem:[#allocation2] sm:$0xff] %vm34, %v207
    %216 = vst.msk [vmem:[#allocation2 + $0x8] sm:$0xff] %vm34, %v212
    // Predicated region
    $region22: #{tpu_custom_call.1} parent=1 // pred_check
      _
    $region23: #{tpu_custom_call.1} parent=1 // pred_check_branch
      %218 = sbr.rel (0) target = $region25
    $region24: #{tpu_custom_call.1} parent=1 // pred_region
      %s220 = ssub.s32 256, 256
      %221 = vsyncadd [#allocation3], %s220
      %s222 = sshll.u32 [#allocation2], 4
      %s223 = int_to_ptr.vmem [resolvable:$true] %s222
      %228 = dma.vmem_to_hbm [thread:$0]  %s223, 256, %s5, [#allocation3], 128, 128, 8
    $region25: #{tpu_custom_call.1} parent=1 // pred_fallthru
      _
    // Predicated region
    $region26: #{tpu_custom_call.1} parent=1 // pred_check
      _
    $region27: #{tpu_custom_call.1} parent=1 // pred_check_branch
      %230 = sbr.rel (0) target = $region29
    $region28: #{tpu_custom_call.1} parent=1 // pred_region
      %231 = dma.done [#allocation3], 256
    $region29: #{tpu_custom_call.1} parent=1 // pred_fallthru
      _
    %232 = vsyncpa [#allocation3], 1

</llo_original>
